<compile_context>
chip_gen: v6e
topology: v6e:2x2x1
jax: 0.10.0
libtpu: 0.0.40
codegen_flags: <defaults>
</compile_context>

<pallas_src>
import jax
import jax.numpy as jnp
from jax.experimental import pallas as pl
from jax.experimental.pallas import tpu as pltpu

_LANE = 128
# Sublane packing per element size (f32 -> 8, bf16 -> 16, int8/fp8 -> 32).
_SUBLANE_PACK = {4: 8, 2: 16, 1: 32}
# Below this, a fused XLA add beats kernel-launch + per-step overhead.
_FAST_PATH_BYTES = 128 * 1024


def _add_kernel(y0_ref, x_ref, out_ref):
    # Purely memory-bound elementwise residual add on the current VMEM tile.
    out_ref[...] = y0_ref[...] + x_ref[...]


def _round_up(n, m):
    return ((n + m - 1) // m) * m


def _pallas_add_flat(cf, xf, tile_rows, lane):
    rows = cf.shape[0]
    grid = (pl.cdiv(rows, tile_rows),)  # ragged last block handled by Pallas
    return pl.pallas_call(
        _add_kernel,
        out_shape=jax.ShapeDtypeStruct((rows, lane), cf.dtype),
        grid_spec=pltpu.PrefetchScalarGridSpec(
            num_scalar_prefetch=0,
            grid=grid,
            in_specs=[
                pl.BlockSpec((tile_rows, lane), lambda i: (i, 0)),
                pl.BlockSpec((tile_rows, lane), lambda i: (i, 0)),
            ],
            out_specs=pl.BlockSpec((tile_rows, lane), lambda i: (i, 0)),
        ),
        compiler_params=pltpu.CompilerParams(
            dimension_semantics=("parallel",)),
        # Container input aliases the output: new_container0 == y in the
        # common (!keep_original) path; lets XLA reuse a donated buffer.
        input_output_aliases={0: 0},
    )(cf, xf)


def add_layer_forward(container0, x, do_clone=True, keep_original=False,
                      force_pallas=False):
    """Pallas implementation of AddLayer.forward.

    Returns (y, new_container0) where y = container0 + x and new_container0
    is the value the module would store back (== y unless keep_original).
    """
    if isinstance(x, tuple):
        x = x[0]
    if isinstance(container0, tuple):
        container0 = container0[0]
    assert container0.shape == x.shape and container0.dtype == x.dtype

    orig_shape = x.shape
    total = x.size
    itemsize = jnp.dtype(x.dtype).itemsize
    sub = _SUBLANE_PACK.get(itemsize, 8)
    lane = _LANE

    small = total * itemsize < _FAST_PATH_BYTES
    misaligned = (total % lane) != 0 or total == 0

    if misaligned or (small and not force_pallas):
        # Fast path: fused XLA elementwise add; no kernel-launch overhead and
        # no layout gymnastics for lane-misaligned sizes.
        y = container0 + x
    else:
        rows = total // lane
        cf = container0.reshape(rows, lane)
        xf = x.reshape(rows, lane)

        # ~1 MiB blocks (dtype-aware): roofline-sized on all generations,
        # 3 arrays x 2 buffers ~= 6 MiB of VMEM — far under every scoped
        # default, so no vmem_limit_bytes override needed.
        target_rows = max(sub, ((1 << 20) // (lane * itemsize)) // sub * sub)

        if rows > sub:
            # Ensure at least 2 grid steps so the parallel axis can shard
            # across v7x's two TensorCores (harmless elsewhere).
            half_rows = _round_up(pl.cdiv(rows, 2), sub)
            tile_rows = max(sub, min(target_rows, half_rows))
        else:
            tile_rows = sub

        y = _pallas_add_flat(cf, xf, tile_rows, lane).reshape(orig_shape)

    # do_clone only affects PyTorch aliasing, not values.
    new_container0 = container0 if keep_original else y
    return y, new_container0


if __name__ == "__main__":
    key = jax.random.PRNGKey(0)
    k1, k2, k3, k4 = jax.random.split(key, 4)

    # Small module-typical NCHW residual shape -> fast path.
    x_s = jax.random.normal(k1, (2, 4, 16, 16), dtype=jnp.float32)
    c_s = jax.random.normal(k2, (2, 4, 16, 16), dtype=jnp.float32)
    ref_s = c_s + x_s

    y_s, nc_s = add_layer_forward(c_s, x_s)
    jax.block_until_ready(y_s)
    assert jnp.allclose(y_s, ref_s, atol=1e-6), "fast-path mismatch"
    assert jnp.allclose(nc_s, ref_s, atol=1e-6), "fast-path container mismatch"

    # Same small shape forced through the Pallas kernel (exercises the tiled
    # path: 16 rows x 128 lanes, (8,128) blocks, 2 parallel grid steps).
    y_sp, nc_sp = add_layer_forward(c_s, x_s, force_pallas=True)
    jax.block_until_ready(y_sp)
    assert jnp.allclose(y_sp, ref_s, atol=1e-6), "kernel mismatch (small)"
    assert jnp.allclose(nc_sp, ref_s, atol=1e-6), "kernel container mismatch"

    # Medium shape (512 KiB f32) takes the Pallas path by size.
    x_m = jax.random.normal(k3, (8, 16, 32, 32), dtype=jnp.float32)
    c_m = jax.random.normal(k4, (8, 16, 32, 32), dtype=jnp.float32)
    ref_m = c_m + x_m

    y_m, nc_m = add_layer_forward(c_m, x_m)
    jax.block_until_ready(y_m)
    assert jnp.allclose(y_m, ref_m, atol=1e-6), "kernel mismatch (medium)"
    assert jnp.allclose(nc_m, ref_m, atol=1e-6), "container mismatch (medium)"

    # keep_original=True leaves the stored tensor untouched.
    y_k, nc_k = add_layer_forward(c_m, x_m, keep_original=True)
    jax.block_until_ready(y_k)
    assert jnp.allclose(y_k, ref_m, atol=1e-6), "keep_original y mismatch"
    assert jnp.allclose(nc_k, c_m, atol=1e-6), "keep_original container changed"

    print("KERNEL_OK")
</pallas_src>

<mosaic_0001>
module attributes {stable_mosaic.version = 11 : i64} {
  func.func @_add_kernel(%arg0: i32, %arg1: memref<8x128xf32, #tpu.memory_space<vmem>>, %arg2: memref<8x128xf32, #tpu.memory_space<vmem>>, %arg3: memref<8x128xf32, #tpu.memory_space<vmem>>) attributes {dimension_semantics = [#tpu.dimension_semantics<parallel>], iteration_bounds = array<i64: 2>, scalar_prefetch = 0 : i64, scratch_operands = 0 : i64, tpu.core_type = #tpu.core_type<tc>, window_params = [{transform_indices = @transform_0, window_bounds = array<i64: 8, 128>}, {transform_indices = @transform_1, window_bounds = array<i64: 8, 128>}, {transform_indices = @transform_2, window_bounds = array<i64: 8, 128>}]} {
    %c0 = arith.constant 0 : index
    %c0_0 = arith.constant 0 : index
    %0 = vector.load %arg1[%c0, %c0_0] : memref<8x128xf32, #tpu.memory_space<vmem>>, vector<8x128xf32>
    %c0_1 = arith.constant 0 : index
    %c0_2 = arith.constant 0 : index
    %1 = vector.load %arg2[%c0_1, %c0_2] : memref<8x128xf32, #tpu.memory_space<vmem>>, vector<8x128xf32>
    %2 = arith.addf %0, %1 : vector<8x128xf32>
    %c0_3 = arith.constant 0 : index
    %c0_4 = arith.constant 0 : index
    %3 = vector.load %arg3[%c0_3, %c0_4] : memref<8x128xf32, #tpu.memory_space<vmem>>, vector<8x128xf32>
    tpu.vector_store %arg3[%c0_3, %c0_4], %2 {strides = array<i32>} : memref<8x128xf32, #tpu.memory_space<vmem>>, vector<8x128xf32>,
    return
  }
  func.func @transform_0(%arg0: i32) -> (i32, i32) {
    %c0_i32 = arith.constant 0 : i32
    %c0_i32_0 = arith.constant 0 : i32
    return %arg0, %c0_i32 : i32, i32
  }
  func.func @transform_1(%arg0: i32) -> (i32, i32) {
    %c0_i32 = arith.constant 0 : i32
    %c0_i32_0 = arith.constant 0 : i32
    return %arg0, %c0_i32 : i32, i32
  }
  func.func @transform_2(%arg0: i32) -> (i32, i32) {
    %c0_i32 = arith.constant 0 : i32
    %c0_i32_0 = arith.constant 0 : i32
    return %arg0, %c0_i32 : i32, i32
  }
}

</mosaic_0001>

<llo_original>
// kernel: tpu_custom_call.1
$region0: #{tpu_custom_call.1}
  #allocation0 [shape = 'u32[]', space=smem, size = 0x4, offset = 0x4, fixed_abs, tag = 'smem constant byte address 0x4 - core index']
  #allocation1 [shape = 'u32[144,128]{1,0:T(1,128)}', space=vmem, size = 0x12000, scoped, tag = 'internal scratch']
  %s0 = inlined_call_operand.hbm [shape: f32[16,128], index: 0, kind: input, shape index: {}, may-alias: {0,2}]
  %s1 = inlined_call_operand.vmem [shape: f32[16,128], index: 1, kind: input, shape index: {}]
  %s2 = inlined_call_operand.hbm [shape: f32[16,128], index: 2, kind: output, shape index: {}, may-alias: {0,2}]
  %s3 = sld [smem:[#allocation0]]
  $region45: #{tpu_custom_call.1} parent=0
    _
  %s5 = ssub.s32 1, %s3
  %s6 = scalar_select 0, %s5, %s3
  $region1: #{tpu_custom_call.1} parent=0
    #allocation2 [shape = 'u8[8192]{0}', space=vmem, size = 0x2000, scoped, tag = 'input window, operand 0']
    #allocation3 [shape = 's32[2]{0}', space=sflag, size = 0x8, scoped, tag = 'scoped memory for tpu_custom_call.1']
    #allocation4 [shape = 's32[2]{0}', space=sflag, size = 0x8, scoped, tag = 'scoped memory for tpu_custom_call.1']
    #allocation5 [shape = 'u8[8192]{0}', space=vmem, size = 0x2000, scoped, tag = 'output window, operand 0']
    %7 = vsyncpa [#allocation3], 0
    %s8 = scalar_lea.sflag [#allocation3], 1
    %9 = vsyncpa %s8, 0
    %10 = vsyncpa [#allocation4], 0
    %s11 = scalar_lea.sflag [#allocation4], 1
    %12 = vsyncpa %s11, 0
    loop: start=0, step=1, limit=4
    $region2: #{tpu_custom_call.1} parent=1 // loop_pre_header
      _
    $region3: #{tpu_custom_call.1} parent=1 // loop_header
      %s14 = sphi 0, %s18
      %p15 = scmp.ge.s32.totalorder %s14, 4
      %s24 = sphi 0, %s26
      %s27 = sphi 0, %s24
      %s28 = sphi 0, %s27
      %s44 = sphi 0, %s28
      %s50 = sphi 0, %s52
      %s53 = sphi 0, %s50
      %s54 = sphi 0, %s53
      %s70 = sphi 0, %s54
      %s76 = sphi 0, %s78
      %s79 = sphi 0, %s76
      %s80 = sphi 0, %s79
      %s96 = sphi 0, %s80
    $region4: #{tpu_custom_call.1} parent=1 // loop_header_branch
      %17 = sbr.rel (%p15) target = $region8
    $region5: #{tpu_custom_call.1} parent=1 // loop_body
      %s19 = ssub.s32 %s14, 1
      %s20 = ssub.s32 %s14, 2
      %s21 = sadd.s32 %s14, 1
      %s22 = ssub.s32 %s14, %s21
      %p23 = scmp.eq.s32.totalorder %s22, 0
      %s25 = sadd.s32 %s24, 1
      %s26 = scalar_select %p23, %s24, %s25
      %p29 = pneg %p23
      %p30 = scmp.eq.s32.totalorder %s14, 1
      %p31 = por %p29, %p30
      %p32 = scmp.ne.s32.totalorder %s24, %s27
      %p33 = scmp.eq.s32.totalorder %s14, 0
      %p34 = por %p32, %p33
      %p35 = scmp.ne.s32.totalorder %s24, %s27
      %p36 = scmp.eq.s32.totalorder %s19, 1
      %p37 = por %p35, %p36
      %p38 = scmp.ne.s32.totalorder %s27, %s28
      %p39 = scmp.eq.s32.totalorder %s19, 0
      %p40 = por %p38, %p39
      %p41 = scmp.ne.s32.totalorder %s27, %s28
      %p42 = scmp.eq.s32.totalorder %s20, 1
      %p43 = por %p41, %p42
      %p45 = scmp.ne.s32.totalorder %s28, %s44
      %p46 = scmp.eq.s32.totalorder %s20, 0
      %p47 = por %p45, %p46
      %s48 = ssub.s32 %s14, %s21
      %p49 = scmp.eq.s32.totalorder %s48, 0
      %s51 = sadd.s32 %s50, 1
      %s52 = scalar_select %p49, %s50, %s51
      %p55 = pneg %p49
      %p56 = scmp.eq.s32.totalorder %s14, 1
      %p57 = por %p55, %p56
      %p58 = scmp.ne.s32.totalorder %s50, %s53
      %p59 = scmp.eq.s32.totalorder %s14, 0
      %p60 = por %p58, %p59
      %p61 = scmp.ne.s32.totalorder %s50, %s53
      %p62 = scmp.eq.s32.totalorder %s19, 1
      %p63 = por %p61, %p62
      %p64 = scmp.ne.s32.totalorder %s53, %s54
      %p65 = scmp.eq.s32.totalorder %s19, 0
      %p66 = por %p64, %p65
      %p67 = scmp.ne.s32.totalorder %s53, %s54
      %p68 = scmp.eq.s32.totalorder %s20, 1
      %p69 = por %p67, %p68
      %p71 = scmp.ne.s32.totalorder %s54, %s70
      %p72 = scmp.eq.s32.totalorder %s20, 0
      %p73 = por %p71, %p72
      %s74 = ssub.s32 %s14, %s21
      %p75 = scmp.eq.s32.totalorder %s74, 0
      %s77 = sadd.s32 %s76, 1
      %s78 = scalar_select %p75, %s76, %s77
      %p81 = pneg %p75
      %p82 = scmp.eq.s32.totalorder %s14, 1
      %p83 = por %p81, %p82
      %p84 = scmp.ne.s32.totalorder %s76, %s79
      %p85 = scmp.eq.s32.totalorder %s14, 0
      %p86 = por %p84, %p85
      %p87 = scmp.ne.s32.totalorder %s76, %s79
      %p88 = scmp.eq.s32.totalorder %s19, 1
      %p89 = por %p87, %p88
      %p90 = scmp.ne.s32.totalorder %s79, %s80
      %p91 = scmp.eq.s32.totalorder %s19, 0
      %p92 = por %p90, %p91
      %p93 = scmp.ne.s32.totalorder %s79, %s80
      %p94 = scmp.eq.s32.totalorder %s20, 1
      %p95 = por %p93, %p94
      %p97 = scmp.ne.s32.totalorder %s80, %s96
      %p98 = scmp.eq.s32.totalorder %s20, 0
      %p99 = por %p97, %p98
      %p100 = scmp.le.s32.totalorder 1, %s14
      %p101 = scmp.lt.s32.totalorder %s14, 3
      %p102 = pnand %p100, %p101
      %p103 = pneg %p102
      // Predicated region
      $region9: #{tpu_custom_call.1} parent=5 // pred_check
        _
      $region10: #{tpu_custom_call.1} parent=5 // pred_check_branch
        %105 = sbr.rel (%p102) target = $region12
      $region11: #{tpu_custom_call.1} parent=5 // pred_region
        %s106 = ssub.s32 %s14, 1
      $region12: #{tpu_custom_call.1} parent=5 // pred_fallthru
        _
      %p107 = scmp.lt.s32.totalorder %s14, 2
      // Predicated region
      $region13: #{tpu_custom_call.1} parent=5 // pred_check
        %p108 = pneg %p107
      $region14: #{tpu_custom_call.1} parent=5 // pred_check_branch
        %110 = sbr.rel (%p108) target = $region16
      $region15: #{tpu_custom_call.1} parent=5 // pred_region
        // Predicated region
        $region17: #{tpu_custom_call.1} parent=15 // pred_check
          %p111 = pneg %p34
        $region18: #{tpu_custom_call.1} parent=15 // pred_check_branch
          %113 = sbr.rel (%p111) target = $region20
        $region19: #{tpu_custom_call.1} parent=15 // pred_region
          %s114 = sand.u32 %s24, 1
          %s115 = scalar_lea.sflag [#allocation3], %s114
          %s116 = sand.u32 %s24, 1
          %s117 = smul.addr %s116, 8
          %s118 = scalar_lea.vmem [#allocation2], %s117
          %s120 = ssub.s32 128, 128
          %121 = vsyncadd %s115, %s120
          %s122 = smul.addr %s14, 128
          %s123 = scalar_lea.hbm %s0, %s122
          %s125 = sshll.u32 %s118, 4
          %s126 = int_to_ptr.vmem [resolvable:$true] %s125
          %128 = dma.hbm_to_vmem [thread:$0]  %s123, 128, %s126, %s115
        $region20: #{tpu_custom_call.1} parent=15 // pred_fallthru
          _
        // Predicated region
        $region21: #{tpu_custom_call.1} parent=15 // pred_check
          %p129 = pneg %p60
        $region22: #{tpu_custom_call.1} parent=15 // pred_check_branch
          %131 = sbr.rel (%p129) target = $region24
        $region23: #{tpu_custom_call.1} parent=15 // pred_region
          %p132 = scmp.lt.s32.totalorder %s14, 1
          %s133 = scalar_select %p132, %s14, 1
          %s134 = smul.addr %s133, 8
          %s135 = scalar_lea.vmem %s1, %s134
        $region24: #{tpu_custom_call.1} parent=15 // pred_fallthru
          _
      $region16: #{tpu_custom_call.1} parent=5 // pred_fallthru
        _
      %p136 = scmp.le.s32.totalorder 1, %s14
      %p137 = scmp.lt.s32.totalorder %s14, 3
      %p138 = pnand %p136, %p137
      %p139 = pneg %p138
      // Predicated region
      $region25: #{tpu_custom_call.1} parent=5 // pred_check
        _
      $region26: #{tpu_custom_call.1} parent=5 // pred_check_branch
        %141 = sbr.rel (%p138) target = $region28
      $region27: #{tpu_custom_call.1} parent=5 // pred_region
        %s142 = ssub.s32 %s14, 1
        %s143 = sand.u32 %s27, 1
        %s144 = scalar_lea.sflag [#allocation3], %s143
        %s145 = sand.u32 %s27, 1
        %s146 = smul.addr %s145, 8
        %s147 = scalar_lea.vmem [#allocation2], %s146
        // Predicated region
        $region29: #{tpu_custom_call.1} parent=27 // pred_check
          %p148 = pneg %p40
        $region30: #{tpu_custom_call.1} parent=27 // pred_check_branch
          %150 = sbr.rel (%p148) target = $region32
        $region31: #{tpu_custom_call.1} parent=27 // pred_region
          %151 = dma.done %s144, 128
        $region32: #{tpu_custom_call.1} parent=27 // pred_fallthru
          _
        %s152 = sand.u32 %s27, 1
        %s153 = scalar_lea.sflag [#allocation3], %s152
        %s154 = sand.u32 %s27, 1
        %s155 = smul.addr %s154, 8
        %s156 = scalar_lea.vmem [#allocation2], %s155
        %p157 = pneg %p40
        %p158 = pneg %p37
        %p159 = scmp.lt.s32.totalorder %s19, 1
        %s160 = scalar_select %p159, %s19, 1
        %s161 = smul.addr %s160, 8
        %s162 = scalar_lea.vmem %s1, %s161
        %p163 = pneg %p66
        %p164 = pneg %p63
        %p165 = pneg %p92
        %p166 = pneg %p89
        %s167 = sand.u32 %s79, 1
        %s168 = scalar_lea.sflag [#allocation4], %s167
        %s169 = sand.u32 %s79, 1
        %s170 = smul.addr %s169, 8
        %s171 = scalar_lea.vmem [#allocation5], %s170
        %p172 = scmp.lt.s32.totalorder %s19, 1
        %s173 = scalar_select %p172, %s19, 1
        %s174 = smul.addr %s173, 8
        %s175 = scalar_lea.vmem %s1, %s174
        %v176 = vld [vmem:[%s147] sm:$0xff]
        %v177 = vld [vmem:[%s175] sm:$0xff]
        %v178 = vadd.f32 %v176, %v177
        %179 = vst [vmem:[%s171] sm:$0xff] %v178
        %s180 = sand.u32 %s79, 1
        %s181 = scalar_lea.sflag [#allocation4], %s180
        %s182 = sand.u32 %s79, 1
        %s183 = smul.addr %s182, 8
        %s184 = scalar_lea.vmem [#allocation5], %s183
        // Predicated region
        $region33: #{tpu_custom_call.1} parent=27 // pred_check
          %p185 = pneg %p89
        $region34: #{tpu_custom_call.1} parent=27 // pred_check_branch
          %187 = sbr.rel (%p185) target = $region36
        $region35: #{tpu_custom_call.1} parent=27 // pred_region
          %s189 = ssub.s32 128, 128
          %190 = vsyncadd %s181, %s189
          %s191 = smul.addr %s19, 128
          %s192 = scalar_lea.hbm %s2, %s191
          %s194 = sshll.u32 %s184, 4
          %s195 = int_to_ptr.vmem [resolvable:$true] %s194
          %197 = dma.vmem_to_hbm [thread:$0]  %s195, 128, %s192, %s181
        $region36: #{tpu_custom_call.1} parent=27 // pred_fallthru
          _
      $region28: #{tpu_custom_call.1} parent=5 // pred_fallthru
        _
      %p198 = scmp.le.s32.totalorder 2, %s14
      // Predicated region
      $region37: #{tpu_custom_call.1} parent=5 // pred_check
        %p199 = pneg %p198
      $region38: #{tpu_custom_call.1} parent=5 // pred_check_branch
        %201 = sbr.rel (%p199) target = $region40
      $region39: #{tpu_custom_call.1} parent=5 // pred_region
        %s202 = ssub.s32 %s14, 2
        // Predicated region
        $region41: #{tpu_custom_call.1} parent=39 // pred_check
          %p203 = pneg %p95
        $region42: #{tpu_custom_call.1} parent=39 // pred_check_branch
          %205 = sbr.rel (%p203) target = $region44
        $region43: #{tpu_custom_call.1} parent=39 // pred_region
          %s206 = sand.u32 %s80, 1
          %s207 = scalar_lea.sflag [#allocation4], %s206
          %s208 = sand.u32 %s80, 1
          %s209 = smul.addr %s208, 8
          %s210 = scalar_lea.vmem [#allocation5], %s209
          %211 = dma.done %s207, 128
        $region44: #{tpu_custom_call.1} parent=39 // pred_fallthru
          _
      $region40: #{tpu_custom_call.1} parent=5 // pred_fallthru
        _
    $region6: #{tpu_custom_call.1} parent=1 // loop_footer
      %s18 = sadd.s32 1, %s14
    $region7: #{tpu_custom_call.1} parent=1 // loop_footer_branch
      %13 = sbr.rel target = $region3
    $region8: #{tpu_custom_call.1} parent=1 // loop_exit
      _
    %212 = vsyncpa [#allocation3], 1
    %s213 = scalar_lea.sflag [#allocation3], 1
    %214 = vsyncpa %s213, 1
    %215 = vsyncpa [#allocation4], 1
    %s216 = scalar_lea.sflag [#allocation4], 1
    %217 = vsyncpa %s216, 1

</llo_original>
